<compile_context>
chip_gen: v7x
topology: tpu7x:2x2x1
jax: 0.10.0
libtpu: 0.0.40
codegen_flags: <defaults>
</compile_context>

<pallas_src>
import functools

import jax
import jax.numpy as jnp
from jax import lax
from jax.experimental import pallas as pl
from jax.experimental.pallas import tpu as pltpu


# ---------------------------------------------------------------------------
# Hardware / tiling helpers
# ---------------------------------------------------------------------------
def _vmem_limit_bytes():
    """Generation-aware scoped-VMEM request (never more than 3/4 physical)."""
    try:
        cap = pltpu.get_tpu_info().vmem_capacity_bytes
    except Exception:
        cap = 64 * 1024 * 1024          # conservative fallback (v7x physical)
    return int(min(64 * 1024 * 1024, (cap * 3) // 4))


def _pick_tm(m):
    """Row tile.  Split rows (parallel grid axis for v7x's 2 TensorCores)
    only when compute-bound enough to pay for re-fetching the RHS rows."""
    if m >= 1024 and m % 16 == 0:
        return m // 2
    return m


def _pick_tk(k, *, rows_streaming, resident_bytes, vmem_budget_bytes):
    """Largest K tile that divides k, is a multiple of 128 (or the full k),
    and keeps the double-buffered f32 feature tiles inside the budget."""
    if k % 128 != 0:
        return k                        # only reached for small, un-padded k
    avail = max(vmem_budget_bytes - resident_bytes,
                2 * rows_streaming * 128 * 4)
    budget_tk = avail // (2 * rows_streaming * 4)   # f32 stream, 2 buffers
    tk = min(k, max(128, (budget_tk // 128) * 128))
    while k % tk != 0:                  # terminates: k % 128 == 0
        tk -= 128
    return tk


def _prep_features(x):
    """(a,b,c,d) -> (m, k) f32 features.  K is zero-padded to a multiple of
    128 whenever it has to be tiled (zero columns don't change F @ F^T)."""
    a, b, c, d = x.shape
    m, k = a * b, c * d
    feats = x.reshape(m, k).astype(jnp.float32)
    if k % 128 != 0 and k > 128:
        k_pad = ((k + 127) // 128) * 128
        feats = jnp.pad(feats, ((0, 0), (0, k_pad - k)))
        k = k_pad
    return feats, m, k


def _check_tm(m, tm):
    assert m % tm == 0 and (tm == m or tm % 8 == 0), (m, tm)


# ---------------------------------------------------------------------------
# Kernel bodies
# ---------------------------------------------------------------------------
def _gram_update(lhs_ref, rhs_ref, mxu_dtype):
    # Cast right before the dot: single-pass bf16 MXU with f32 accumulation.
    # (On v5e this lowers to a pack; all other arithmetic stays f32.)
    lhs = lhs_ref[...].astype(mxu_dtype)
    rhs = lhs if rhs_ref is lhs_ref else rhs_ref[...].astype(mxu_dtype)
    # Contract dim 1 against dim 1 -> F @ F^T without an XLU transpose.
    return lax.dot_general(lhs, rhs, (((1,), (1,)), ((), ())),
                           preferred_element_type=jnp.float32)


def _gram_body(lhs_ref, rhs_ref, g_ref, *, inv_n, mxu_dtype):
    kk = pl.program_id(1)

    @pl.when(kk == 0)
    def _():
        g_ref[...] = jnp.zeros_like(g_ref)

    # Accumulate directly into the resident f32 output block (no scratch).
    g_ref[...] += _gram_update(lhs_ref, rhs_ref, mxu_dtype)

    @pl.when(kk == pl.num_programs(1) - 1)
    def _():
        g_ref[...] *= jnp.float32(inv_n)


def _gram_kernel_square(f_ref, g_ref, *, inv_n, mxu_dtype):
    _gram_body(f_ref, f_ref, g_ref, inv_n=inv_n, mxu_dtype=mxu_dtype)


def _gram_kernel_split(lhs_ref, rhs_ref, g_ref, *, inv_n, mxu_dtype):
    _gram_body(lhs_ref, rhs_ref, g_ref, inv_n=inv_n, mxu_dtype=mxu_dtype)


def _loss_body(lhs_ref, rhs_ref, t_ref, loss_ref, acc_ref, *,
               inv_n, inv_m2, mxu_dtype):
    kk = pl.program_id(1)

    @pl.when(kk == 0)
    def _():
        acc_ref[...] = jnp.zeros_like(acc_ref)

    acc_ref[...] += _gram_update(lhs_ref, rhs_ref, mxu_dtype)

    @pl.when(kk == pl.num_programs(1) - 1)
    def _():
        # Fused epilogue: scale once, squared error vs target row block,
        # partial sum straight to a scalar — this row block's G never leaves
        # VMEM.
        diff = acc_ref[...] * jnp.float32(inv_n) - t_ref[...]
        loss_ref[0, 0] = jnp.sum(diff * diff) * jnp.float32(inv_m2)


def _loss_kernel_square(f_ref, t_ref, loss_ref, acc_ref, *,
                        inv_n, inv_m2, mxu_dtype):
    _loss_body(f_ref, f_ref, t_ref, loss_ref, acc_ref,
               inv_n=inv_n, inv_m2=inv_m2, mxu_dtype=mxu_dtype)


def _loss_kernel_split(lhs_ref, rhs_ref, t_ref, loss_ref, acc_ref, *,
                       inv_n, inv_m2, mxu_dtype):
    _loss_body(lhs_ref, rhs_ref, t_ref, loss_ref, acc_ref,
               inv_n=inv_n, inv_m2=inv_m2, mxu_dtype=mxu_dtype)


# ---------------------------------------------------------------------------
# Wrappers
# ---------------------------------------------------------------------------
def gram_matrix(x, *, tm=None, tk=None, mxu_dtype=jnp.bfloat16):
    """x: (a, b, c, d) -> (a*b, a*b) f32 gram matrix / (a*b*c*d)."""
    a, b, c, d = x.shape
    inv_n = 1.0 / (a * b * c * d)
    feats, m, k = _prep_features(x)
    tm = _pick_tm(m) if tm is None else tm
    _check_tm(m, tm)
    split = tm != m
    vmem_limit = _vmem_limit_bytes()
    resident = 2 * tm * m * 4                      # output block, 2 buffers
    rows = (tm + m) if split else m
    if tk is None:
        tk = _pick_tk(k, rows_streaming=rows, resident_bytes=resident,
                      vmem_budget_bytes=int(vmem_limit * 0.75))
    assert k % tk == 0, (k, tk)
    n_i, n_k = m // tm, k // tk

    lhs_spec = pl.BlockSpec((tm, tk), lambda i, kk: (i, kk))
    out_spec = pl.BlockSpec((tm, m), lambda i, kk: (i, 0))
    if split:
        kernel = functools.partial(_gram_kernel_split, inv_n=inv_n,
                                   mxu_dtype=mxu_dtype)
        in_specs = [lhs_spec, pl.BlockSpec((m, tk), lambda i, kk: (0, kk))]
        operands = (feats, feats)
        in_bytes = (1 + n_i) * m * k * 4
    else:
        kernel = functools.partial(_gram_kernel_square, inv_n=inv_n,
                                   mxu_dtype=mxu_dtype)
        in_specs = [lhs_spec]
        operands = (feats,)
        in_bytes = m * k * 4

    # TODO(synk): for very large m a triangular (output-symmetry) tiling would
    # halve the MXU flops; not implemented here.
    return pl.pallas_call(
        kernel,
        out_shape=jax.ShapeDtypeStruct((m, m), jnp.float32),
        grid_spec=pltpu.PrefetchScalarGridSpec(
            num_scalar_prefetch=0,
            grid=(n_i, n_k),
            in_specs=in_specs,
            out_specs=out_spec,
        ),
        compiler_params=pltpu.CompilerParams(
            dimension_semantics=("parallel", "arbitrary"),
            vmem_limit_bytes=vmem_limit,
        ),
        cost_estimate=pl.CostEstimate(
            flops=2 * m * m * k, transcendentals=0,
            bytes_accessed=in_bytes + m * m * 4),
    )(*operands)


def style_loss(x, target_g, *, tm=None, tk=None, mxu_dtype=jnp.bfloat16):
    """Fused gram + MSE: scalar mean((gram(x) - target_g)^2)."""
    a, b, c, d = x.shape
    inv_n = 1.0 / (a * b * c * d)
    feats, m, k = _prep_features(x)
    assert target_g.shape == (m, m), (target_g.shape, m)
    inv_m2 = 1.0 / (m * m)
    tm = _pick_tm(m) if tm is None else tm
    _check_tm(m, tm)
    split = tm != m
    vmem_limit = _vmem_limit_bytes()
    resident = tm * m * 4 + 2 * tm * m * 4        # acc + target (2 buffers)
    rows = (tm + m) if split else m
    if tk is None:
        tk = _pick_tk(k, rows_streaming=rows, resident_bytes=resident,
                      vmem_budget_bytes=int(vmem_limit * 0.75))
    assert k % tk == 0, (k, tk)
    n_i, n_k = m // tm, k // tk

    lhs_spec = pl.BlockSpec((tm, tk), lambda i, kk: (i, kk))
    t_spec = pl.BlockSpec((tm, m), lambda i, kk: (i, 0))
    out_spec = pl.BlockSpec((1, 1), lambda i, kk: (i, 0),
                            memory_space=pltpu.SMEM)
    if split:
        kernel = functools.partial(_loss_kernel_split, inv_n=inv_n,
                                   inv_m2=inv_m2, mxu_dtype=mxu_dtype)
        in_specs = [lhs_spec, pl.BlockSpec((m, tk), lambda i, kk: (0, kk)),
                    t_spec]
        operands = (feats, feats, target_g)
        in_bytes = (1 + n_i) * m * k * 4 + m * m * 4
    else:
        kernel = functools.partial(_loss_kernel_square, inv_n=inv_n,
                                   inv_m2=inv_m2, mxu_dtype=mxu_dtype)
        in_specs = [lhs_spec, t_spec]
        operands = (feats, target_g)
        in_bytes = m * k * 4 + m * m * 4

    partials = pl.pallas_call(
        kernel,
        out_shape=jax.ShapeDtypeStruct((n_i, 1), jnp.float32),
        grid_spec=pltpu.PrefetchScalarGridSpec(
            num_scalar_prefetch=0,
            grid=(n_i, n_k),
            in_specs=in_specs,
            out_specs=out_spec,
            scratch_shapes=[pltpu.VMEM((tm, m), jnp.float32)],
        ),
        compiler_params=pltpu.CompilerParams(
            dimension_semantics=("parallel", "arbitrary"),
            vmem_limit_bytes=vmem_limit,
        ),
        cost_estimate=pl.CostEstimate(
            flops=2 * m * m * k, transcendentals=0,
            bytes_accessed=in_bytes + n_i * 4),
    )(*operands)
    return jnp.sum(partials)


class StyleLoss:
    """JAX/Pallas equivalent of the PyTorch StyleLoss module."""

    def __init__(self, target_feature, *, mxu_dtype=jnp.bfloat16):
        self._mxu_dtype = mxu_dtype
        # target gram is a constant ("detached") buffer
        self.target = lax.stop_gradient(
            gram_matrix(target_feature, mxu_dtype=mxu_dtype))
        self.loss = None

    def __call__(self, x):
        # TODO(synk): pallas_call has no automatic VJP; wrap style_loss in a
        # jax.custom_vjp (dL/dF = 2/M^2 * (dG + dG^T) @ F / n) if gradients
        # w.r.t. x are needed.
        # NOTE: self.loss is Python-side state (like the PyTorch module);
        # under jit/vmap return the loss instead of stashing it.
        self.loss = style_loss(x, self.target, mxu_dtype=self._mxu_dtype)
        return x  # forward passes the input through unchanged


# ---------------------------------------------------------------------------
# Demo / correctness check
# ---------------------------------------------------------------------------
if __name__ == "__main__":
    key = jax.random.PRNGKey(0)
    k_t, k_x, k_t2, k_x2 = jax.random.split(key, 4)

    # pure-JAX references
    def ref_gram(v, dt):
        aa, bb, cc, dd = v.shape
        f = v.reshape(aa * bb, cc * dd).astype(dt)
        g = jnp.dot(f, f, precision=None,
                    preferred_element_type=jnp.float32) if False else \
            jnp.dot(f, f.T, preferred_element_type=jnp.float32)
        return g / (aa * bb * cc * dd)

    def ref_loss(v, t, dt):
        return jnp.mean((ref_gram(v, dt) - ref_gram(t, dt)) ** 2)

    # ---- main module-sized test (default bf16 MXU feed) -------------------
    a, b, c, d = 2, 4, 16, 16
    target_feature = jax.random.normal(k_t, (a, b, c, d), dtype=jnp.float32)
    x = jax.random.normal(k_x, (a, b, c, d), dtype=jnp.float32)

    style = StyleLoss(target_feature)
    out = jax.block_until_ready(style(x))
    loss = jax.block_until_ready(style.loss)

    assert jnp.allclose(out, x), "forward must return input unchanged"
    assert jnp.allclose(style.target, ref_gram(target_feature, jnp.bfloat16),
                        rtol=1e-3, atol=1e-5)
    rl = ref_loss(x, target_feature, jnp.bfloat16)
    assert jnp.allclose(loss, rl, rtol=1e-3, atol=1e-6), (loss, rl)

    # ---- K-tiled accumulation path (multi-step reduction) -----------------
    loss_tiled = jax.block_until_ready(style_loss(x, style.target, tk=128))
    assert jnp.allclose(loss_tiled, rl, rtol=1e-3, atol=1e-6), (loss_tiled, rl)

    # ---- f32 MXU path (matches the reference numerics) --------------------
    g_f32 = jax.block_until_ready(gram_matrix(x, mxu_dtype=jnp.float32))
    assert jnp.allclose(g_f32, ref_gram(x, jnp.float32),
                        rtol=1e-5, atol=1e-5)

    # ---- split-M (megacore) + non-128-aligned K (padded) path -------------
    a2, b2, c2, d2 = 2, 8, 10, 13           # m=16, k=130 -> padded to 256
    tf2 = jax.random.normal(k_t2, (a2, b2, c2, d2), dtype=jnp.float32)
    x2 = jax.random.normal(k_x2, (a2, b2, c2, d2), dtype=jnp.float32)
    g2_t = gram_matrix(tf2)                  # square path, padded K
    loss2 = jax.block_until_ready(style_loss(x2, g2_t, tm=8, tk=128))
    rl2 = ref_loss(x2, tf2, jnp.bfloat16)
    assert jnp.allclose(loss2, rl2, rtol=1e-3, atol=1e-6), (loss2, rl2)

    print("KERNEL_OK")
</pallas_src>

<mosaic_0001>
module attributes {stable_mosaic.version = 11 : i64} {
  func.func @_gram_kernel_square(%arg0: i32, %arg1: i32, %arg2: memref<8x256xf32, #tpu.memory_space<vmem>>, %arg3: memref<8x8xf32, #tpu.memory_space<vmem>>) attributes {dimension_semantics = [#tpu.dimension_semantics<parallel>, #tpu.dimension_semantics<arbitrary>], iteration_bounds = array<i64: 1, 1>, scalar_prefetch = 0 : i64, scratch_operands = 0 : i64, tpu.core_type = #tpu.core_type<tc>, window_params = [{transform_indices = @transform_0, window_bounds = array<i64: 8, 256>}, {transform_indices = @transform_1, window_bounds = array<i64: 8, 8>}]} {
    %c0_i32 = arith.constant 0 : i32
    %0 = arith.cmpi eq, %arg1, %c0_i32 : i32
    %1 = arith.extui %0 : i1 to i32
    %c0_i32_0 = arith.constant 0 : i32
    %2 = arith.cmpi ne, %1, %c0_i32_0 : i32
    scf.if %2 {
      %cst_8 = arith.constant 0.000000e+00 : f32
      %12 = vector.broadcast %cst_8 : f32 to vector<8x8xf32>
      %c0_9 = arith.constant 0 : index
      %c0_10 = arith.constant 0 : index
      %13 = vector.load %arg3[%c0_9, %c0_10] : memref<8x8xf32, #tpu.memory_space<vmem>>, vector<8x8xf32>
      tpu.vector_store %arg3[%c0_9, %c0_10], %12 {strides = array<i32>} : memref<8x8xf32, #tpu.memory_space<vmem>>, vector<8x8xf32>,
    } else {
    }
    %c0 = arith.constant 0 : index
    %c0_1 = arith.constant 0 : index
    %3 = vector.load %arg3[%c0, %c0_1] : memref<8x8xf32, #tpu.memory_space<vmem>>, vector<8x8xf32>
    %c0_2 = arith.constant 0 : index
    %c0_3 = arith.constant 0 : index
    %4 = vector.load %arg2[%c0_2, %c0_3] : memref<8x256xf32, #tpu.memory_space<vmem>>, vector<8x256xf32>
    %5 = arith.truncf %4 : vector<8x256xf32> to vector<8x256xbf16>
    %cst = arith.constant dense<0.000000e+00> : vector<8x8xf32>
    %6 = tpu.matmul %5, %5, %cst {dimension_numbers = #tpu.dot_dimension_numbers<[1], [1], [0], [0], [0, 0, 1, 0], [], []>} : vector<8x256xbf16>, vector<8x256xbf16>, vector<8x8xf32> -> vector<8x8xf32>
    %7 = arith.addf %3, %6 : vector<8x8xf32>
    %c0_4 = arith.constant 0 : index
    %c0_5 = arith.constant 0 : index
    %8 = vector.load %arg3[%c0_4, %c0_5] : memref<8x8xf32, #tpu.memory_space<vmem>>, vector<8x8xf32>
    tpu.vector_store %arg3[%c0_4, %c0_5], %7 {strides = array<i32>} : memref<8x8xf32, #tpu.memory_space<vmem>>, vector<8x8xf32>,
    %c0_i32_6 = arith.constant 0 : i32
    %9 = arith.cmpi eq, %arg1, %c0_i32_6 : i32
    %10 = arith.extui %9 : i1 to i32
    %c0_i32_7 = arith.constant 0 : i32
    %11 = arith.cmpi ne, %10, %c0_i32_7 : i32
    scf.if %11 {
      %c0_8 = arith.constant 0 : index
      %c0_9 = arith.constant 0 : index
      %12 = vector.load %arg3[%c0_8, %c0_9] : memref<8x8xf32, #tpu.memory_space<vmem>>, vector<8x8xf32>
      %cst_10 = arith.constant 4.8828125E-4 : f32
      %13 = vector.broadcast %cst_10 : f32 to vector<8x8xf32>
      %14 = arith.mulf %12, %13 : vector<8x8xf32>
      %c0_11 = arith.constant 0 : index
      %c0_12 = arith.constant 0 : index
      %15 = vector.load %arg3[%c0_11, %c0_12] : memref<8x8xf32, #tpu.memory_space<vmem>>, vector<8x8xf32>
      tpu.vector_store %arg3[%c0_11, %c0_12], %14 {strides = array<i32>} : memref<8x8xf32, #tpu.memory_space<vmem>>, vector<8x8xf32>,
    } else {
    }
    return
  }
  func.func @transform_0(%arg0: i32, %arg1: i32) -> (i32, i32) {
    %c0_i32 = arith.constant 0 : i32
    return %arg0, %arg1 : i32, i32
  }
  func.func @transform_1(%arg0: i32, %arg1: i32) -> (i32, i32) {
    %c0_i32 = arith.constant 0 : i32
    %c0_i32_0 = arith.constant 0 : i32
    return %arg0, %c0_i32 : i32, i32
  }
}

</mosaic_0001>

<llo_original>
// kernel: tpu_custom_call.1
$region0: #{tpu_custom_call.1}
  #allocation0 [shape = 'u32[]', space=smem, size = 0x4, offset = 0x4, fixed_abs, tag = 'smem constant byte address 0x4 - core index']
  #allocation1 [shape = 'u32[144,128]{1,0:T(1,128)}', space=vmem, size = 0x12000, scoped, tag = 'internal scratch']
  %s0 = inlined_call_operand.hbm [shape: f32[8,256], index: 0, kind: input, shape index: {}]
  %s1 = inlined_call_operand.hbm [shape: f32[8,8], index: 1, kind: output, shape index: {}]
  %s2 = sld [smem:[#allocation0]]
  $region26: #{tpu_custom_call.1} parent=0
    _
  %s4 = ssub.s32 1, %s2
  %s5 = scalar_select 0, %s4, %s2
  $region1: #{tpu_custom_call.1} parent=0
    #allocation2 [shape = 'u8[8192]{0}', space=vmem, size = 0x2000, scoped, tag = 'input window, operand 0, single buffered']
    #allocation3 [shape = 's32[1]{0}', space=sflag, size = 0x4, scoped, tag = 'scoped memory for tpu_custom_call.1']
    #allocation4 [shape = 's32[1]{0}', space=sflag, size = 0x4, scoped, tag = 'scoped memory for tpu_custom_call.1']
    #allocation5 [shape = 'u8[4096]{0}', space=vmem, size = 0x1000, scoped, tag = 'output window, operand 0, single buffered']
    %6 = vsyncpa [#allocation3], 0
    %7 = vsyncpa [#allocation4], 0
    // Predicated region
    $region2: #{tpu_custom_call.1} parent=1 // pred_check
      _
    $region3: #{tpu_custom_call.1} parent=1 // pred_check_branch
      %9 = sbr.rel (0) target = $region5
    $region4: #{tpu_custom_call.1} parent=1 // pred_region
      %s11 = ssub.s32 256, 256
      %12 = vsyncadd [#allocation3], %s11
      %s14 = sshll.u32 [#allocation2], 4
      %s15 = int_to_ptr.vmem [resolvable:$true] %s14
      %17 = dma.hbm_to_vmem [thread:$0]  %s0, 256, %s15, [#allocation3]
    $region5: #{tpu_custom_call.1} parent=1 // pred_fallthru
      _
    // Predicated region
    $region6: #{tpu_custom_call.1} parent=1 // pred_check
      _
    $region7: #{tpu_custom_call.1} parent=1 // pred_check_branch
      %19 = sbr.rel (0) target = $region9
    $region8: #{tpu_custom_call.1} parent=1 // pred_region
      %20 = dma.done [#allocation3], 256
    $region9: #{tpu_custom_call.1} parent=1 // pred_fallthru
      _
    %p22 = scmp.eq.s32.totalorder 0, 0
    // Predicated region
    $region10: #{tpu_custom_call.1} parent=1 // pred_check
      %p23 = pneg %p22
    $region11: #{tpu_custom_call.1} parent=1 // pred_check_branch
      %25 = sbr.rel (%p23) target = $region13
    $region12: #{tpu_custom_call.1} parent=1 // pred_region
      %vm26 = vcmask 64512
      %27 = vst.msk [vmem:[#allocation5] sm:$0xff] %vm26, 0.0
    $region13: #{tpu_custom_call.1} parent=1 // pred_fallthru
      _
    %v28 = vld [vmem:[#allocation5] sm:$0xff]
    %v29 = vld [vmem:[#allocation2] sm:$0xff]
    %v30 = vld [vmem:[#allocation2 + $0x8] sm:$0xff]
    %v31 = vpack.c.bf16 %v29, %v29
    %v32 = vpack.c.bf16 %v30, %v30
    %33 = vmatprep.subr.bf16.mxu0 %v32
    %34 = vmatpush1.bf16.xpose.msra.mxu0 %v31
    %35 = vmatprep.subr.bf16.mxu0 0
    %36 = vmatpush1.bf16.xpose.msra.mxu0 0
    %37 = vmatprep.subr.bf16.mxu0 0
    %38 = vmatpush1.bf16.xpose.msra.mxu0 0
    %39 = vmatprep.subr.bf16.mxu0 0
    %40 = vmatpush1.bf16.xpose.msra.mxu0 0
    %41 = vmatprep.subr.bf16.mxu0 0
    %42 = vmatpush1.bf16.xpose.msra.mxu0 0
    %43 = vmatprep.subr.bf16.mxu0 0
    %44 = vmatpush1.bf16.xpose.msra.mxu0 0
    %45 = vmatprep.subr.bf16.mxu0 0
    %46 = vmatpush1.bf16.xpose.msra.mxu0 0
    %47 = vmatprep.subr.bf16.mxu0 0
    %48 = vmatpush1.bf16.xpose.msra.mxu0 0
    %49 = vmatprep.subr.bf16.mxu0 0
    %50 = vmatpush1.bf16.xpose.msra.mxu0 0
    %51 = vmatprep.subr.bf16.mxu0 0
    %52 = vmatpush1.bf16.xpose.msra.mxu0 0
    %53 = vmatprep.subr.bf16.mxu0 0
    %54 = vmatpush1.bf16.xpose.msra.mxu0 0
    %55 = vmatprep.subr.bf16.mxu0 0
    %56 = vmatpush1.bf16.xpose.msra.mxu0 0
    %57 = vmatprep.subr.bf16.mxu0 0
    %58 = vmatpush1.bf16.xpose.msra.mxu0 0
    %59 = vmatprep.subr.bf16.mxu0 0
    %60 = vmatpush1.bf16.xpose.msra.mxu0 0
    %61 = vmatprep.subr.bf16.mxu0 0
    %62 = vmatpush1.bf16.xpose.msra.mxu0 0
    %63 = vmatprep.subr.bf16.mxu0 0
    %64 = vmatpush1.bf16.xpose.msra.mxu0 0
    %65 = vmatprep.mubr.bf16.mxu0 %v32
    %66 = vmatmul.mubr.bf16.gmra.mrb[0].mxu0 %v31
    %v67 = vpop.f32.mrb[0].mxu0
    %v68 = vadd.f32 0.0, %v67
    %v69 = vpop.f32.mrb[0].mxu0
    %v70 = vpop.f32.mrb[0].mxu0
    %v71 = vpop.f32.mrb[0].mxu0
    %72 = vdwg.mxu0
    %v73 = vadd.f32 %v28, %v68
    %vm74 = vcmask 64512
    %75 = vst.msk [vmem:[#allocation5] sm:$0xff] %vm74, %v73
    // Predicated region
    $region14: #{tpu_custom_call.1} parent=1 // pred_check
      %p76 = pneg %p22
    $region15: #{tpu_custom_call.1} parent=1 // pred_check_branch
      %78 = sbr.rel (%p76) target = $region17
    $region16: #{tpu_custom_call.1} parent=1 // pred_region
      %v79 = vld [vmem:[#allocation5] sm:$0xff]
      %v80 = vmul.f32 %v79, 0.00048828125
      %81 = vst.msk [vmem:[#allocation5] sm:$0xff] %vm74, %v80
    $region17: #{tpu_custom_call.1} parent=1 // pred_fallthru
      _
    // Predicated region
    $region18: #{tpu_custom_call.1} parent=1 // pred_check
      _
    $region19: #{tpu_custom_call.1} parent=1 // pred_check_branch
      %83 = sbr.rel (0) target = $region21
    $region20: #{tpu_custom_call.1} parent=1 // pred_region
      %s85 = ssub.s32 128, 128
      %86 = vsyncadd [#allocation4], %s85
      %s88 = sshll.u32 [#allocation5], 4
      %s89 = int_to_ptr.vmem [resolvable:$true] %s88
      %91 = dma.vmem_to_hbm [thread:$0]  %s89, 128, %s1, [#allocation4]
    $region21: #{tpu_custom_call.1} parent=1 // pred_fallthru
      _
    // Predicated region
    $region22: #{tpu_custom_call.1} parent=1 // pred_check
      _
    $region23: #{tpu_custom_call.1} parent=1 // pred_check_branch
      %93 = sbr.rel (0) target = $region25
    $region24: #{tpu_custom_call.1} parent=1 // pred_region
      %94 = dma.done [#allocation4], 128
    $region25: #{tpu_custom_call.1} parent=1 // pred_fallthru
      _
    %95 = vsyncpa [#allocation3], 1
    %96 = vsyncpa [#allocation4], 1

</llo_original>
